<compile_context>
chip_gen: v6e
topology: v6e:2x2x1
jax: 0.10.0
libtpu: 0.0.40
codegen_flags: <defaults>
</compile_context>

<pallas_src>
import functools

import jax
import jax.numpy as jnp
from jax.experimental import pallas as pl
from jax.experimental.pallas import tpu as pltpu

LEAKY_SLOPE = 0.2
BN_EPS = 1e-5
LANE = 128


def _round_up(n: int, m: int) -> int:
    return ((n + m - 1) // m) * m


def _make_fused_kernel(n_blocks: int, batch: int):
    """Kernel for an n_blocks-deep stack of Linear (no bias) + BN(train) + LeakyReLU."""
    inv_b = 1.0 / float(batch)

    def kernel(*refs):
        # refs = (x_ref, w0, gb0, w1, gb1, ..., o_ref)
        x_ref = refs[0]
        o_ref = refs[-1]
        p = refs[1:-1]

        h = x_ref[...]  # (B, Din_pad) f32, stays on-chip for the whole stack
        for i in range(n_blocks):
            w_ref = p[2 * i]        # (Din_pad, Dout_pad) bf16
            gb_ref = p[2 * i + 1]   # (2, Dout_pad) f32: row 0 = gamma, row 1 = beta
            # Linear (bias dropped: cancelled exactly by train-mode BN mean subtraction).
            # bf16 x bf16 MXU matmul with f32 accumulation.
            y = jnp.dot(h.astype(jnp.bfloat16), w_ref[...],
                        preferred_element_type=jnp.float32)
            # One-pass BatchNorm1d (training) statistics over the batch axis.
            mean = jnp.sum(y, axis=0, keepdims=True) * inv_b          # (1, Dout_pad)
            ex2 = jnp.sum(y * y, axis=0, keepdims=True) * inv_b
            var = jnp.maximum(ex2 - mean * mean, 0.0)                 # guard fp cancellation
            gb = gb_ref[...]
            # gamma folded into the rsqrt scale (EUP); pad columns: gamma==0 -> scale==0.
            scale = gb[0:1, :] * jax.lax.rsqrt(var + BN_EPS)
            shift = gb[1:2, :] - mean * scale
            z = y * scale + shift
            # LeakyReLU(0.2) as mul+max.
            h = jnp.maximum(z, LEAKY_SLOPE * z)
        o_ref[...] = h

    return kernel


def prepare_params(params, d_in: int):
    """Pad / pack / cast parameters ONCE, outside the per-call path.

    params: list of (W (din,dout), b (dout,), gamma (dout,), beta (dout,)).
    Returns a tuple of (W bf16 (din_pad, dout_pad), gamma_beta f32 (2, dout_pad)) per block.
    The Linear bias is intentionally dropped: train-mode BN mean subtraction cancels it exactly.
    """
    blocks = []
    prev_pad = _round_up(d_in, LANE)
    for (w, b, g, be) in params:
        del b  # cancelled by BatchNorm batch-mean subtraction
        din, dout = w.shape
        dout_pad = _round_up(dout, LANE)
        w_p = jnp.pad(w.astype(jnp.float32),
                      ((0, prev_pad - din), (0, dout_pad - dout))).astype(jnp.bfloat16)
        gb = jnp.stack([g, be]).astype(jnp.float32)                 # (2, dout)
        gb_p = jnp.pad(gb, ((0, 0), (0, dout_pad - dout)))          # pad gamma/beta with 0
        blocks.append((w_p, gb_p))
        prev_pad = dout_pad
    return tuple(blocks)


@functools.partial(jax.jit, static_argnums=(2,))
def classifier2_forward(x, blocks, out_dim):
    """x: (B, d_in) f32.  blocks: output of prepare_params.  out_dim: real final width."""
    B, d_in = x.shape
    d_in_pad = blocks[0][0].shape[0]
    x_p = jnp.pad(x.astype(jnp.float32), ((0, 0), (0, d_in_pad - d_in)))

    flat_inputs = [x_p]
    in_specs = [pl.BlockSpec((B, d_in_pad), lambda: (0, 0))]

    total_flops = 0
    transcendentals = 0
    bytes_accessed = x_p.size * 4
    vmem_bytes = x_p.size * 4
    max_pad = d_in_pad
    prev_pad = d_in_pad

    for (w_p, gb_p) in blocks:
        din_pad, dout_pad = w_p.shape
        assert din_pad == prev_pad, "prepared params do not chain"
        flat_inputs += [w_p, gb_p]
        in_specs += [
            pl.BlockSpec((din_pad, dout_pad), lambda: (0, 0)),
            pl.BlockSpec((2, dout_pad), lambda: (0, 0)),
        ]
        total_flops += 2 * B * din_pad * dout_pad + 7 * B * dout_pad   # matmul + BN/act
        transcendentals += dout_pad                                    # rsqrt per feature
        bytes_accessed += w_p.size * 2 + gb_p.size * 4
        vmem_bytes += w_p.size * 2 + gb_p.size * 4
        max_pad = max(max_pad, dout_pad)
        prev_pad = dout_pad

    bytes_accessed += B * prev_pad * 4                                 # output slab
    vmem_bytes += B * prev_pad * 4
    vmem_bytes += 4 * B * max_pad * 4                                  # ~4 live (B, Dmax) f32
    vmem_limit = int(min(100 * 1024 * 1024, max(2 * vmem_bytes + (2 << 20), 4 << 20)))

    out_pad = pl.pallas_call(
        _make_fused_kernel(len(blocks), B),
        out_shape=jax.ShapeDtypeStruct((B, prev_pad), jnp.float32),
        in_specs=in_specs,
        out_specs=pl.BlockSpec((B, prev_pad), lambda: (0, 0)),
        compiler_params=pltpu.CompilerParams(vmem_limit_bytes=vmem_limit),
        cost_estimate=pl.CostEstimate(
            flops=total_flops,
            transcendentals=transcendentals,
            bytes_accessed=bytes_accessed,
        ),
    )(*flat_inputs)

    # Trim lane padding of the final layer's output.
    return out_pad[:, :out_dim]


def init_params(key, layers_dim):
    """Deterministic params matching the module's layer shapes (only layers_dim[:-1] used).

    Linear W/b: uniform(-1/sqrt(fan_in), 1/sqrt(fan_in)) like PyTorch; BN gamma=1, beta=0.
    """
    params = []
    n_blocks = len(layers_dim) - 2
    for i in range(1, n_blocks + 1):
        d_in, d_out = layers_dim[i - 1], layers_dim[i]
        key, kw, kb = jax.random.split(key, 3)
        bound = 1.0 / float(d_in) ** 0.5
        w = jax.random.uniform(kw, (d_in, d_out), jnp.float32, -bound, bound)
        b = jax.random.uniform(kb, (d_out,), jnp.float32, -bound, bound)
        params.append((w, b, jnp.ones((d_out,), jnp.float32), jnp.zeros((d_out,), jnp.float32)))
    return params


def _reference_forward(x, params):
    """Pure-JAX f32 reference (WITH bias, two-pass BN) for a tolerance check."""
    h = x.astype(jnp.float32)
    for (w, b, g, be) in params:
        y = h @ w + b
        mean = jnp.mean(y, axis=0, keepdims=True)
        var = jnp.mean((y - mean) ** 2, axis=0, keepdims=True)   # biased (train-mode) variance
        z = (y - mean) * jax.lax.rsqrt(var + BN_EPS) * g + be
        h = jnp.where(z >= 0, z, LEAKY_SLOPE * z)
    return h


if __name__ == "__main__":
    # Small shapes consistent with the module; blocks: 32->64, 64->48 (last entry unused).
    layers_dim = [32, 64, 48, 16]
    batch = 8  # multiple of 8 -> sublane-dense (B, D) blocks

    key = jax.random.PRNGKey(0)
    key, kx = jax.random.split(key)
    x = jax.random.normal(kx, (batch, layers_dim[0]), jnp.float32)

    params = init_params(key, layers_dim)
    blocks = prepare_params(params, layers_dim[0])   # pad/pack/cast ONCE, outside jit path
    out_dim = layers_dim[-2]

    out = classifier2_forward(x, blocks, out_dim)
    jax.block_until_ready(out)

    assert out.shape == (batch, out_dim), out.shape
    assert bool(jnp.all(jnp.isfinite(out))), "non-finite output"
    # Loose tolerance: kernel uses bf16 matmul inputs + one-pass variance; bias drop is exact.
    ref = _reference_forward(x, params)
    max_err = float(jnp.max(jnp.abs(out - ref)))
    assert max_err < 0.25, f"kernel deviates from f32 reference: max_err={max_err}"
    print("KERNEL_OK")
</pallas_src>

<mosaic_0001>
module attributes {stable_mosaic.version = 11 : i64} {
  func.func @kernel(%arg0: memref<8x128xf32, #tpu.memory_space<vmem>>, %arg1: memref<128x128xbf16, #tpu.memory_space<vmem>>, %arg2: memref<2x128xf32, #tpu.memory_space<vmem>>, %arg3: memref<128x128xbf16, #tpu.memory_space<vmem>>, %arg4: memref<2x128xf32, #tpu.memory_space<vmem>>, %arg5: memref<8x128xf32, #tpu.memory_space<vmem>>) attributes {dimension_semantics = [], scalar_prefetch = 0 : i64, scratch_operands = 0 : i64, tpu.core_type = #tpu.core_type<tc>} {
    %c0 = arith.constant 0 : index
    %c0_0 = arith.constant 0 : index
    %0 = vector.load %arg0[%c0, %c0_0] : memref<8x128xf32, #tpu.memory_space<vmem>>, vector<8x128xf32>
    %1 = arith.truncf %0 : vector<8x128xf32> to vector<8x128xbf16>
    %c0_1 = arith.constant 0 : index
    %c0_2 = arith.constant 0 : index
    %2 = vector.load %arg1[%c0_1, %c0_2] : memref<128x128xbf16, #tpu.memory_space<vmem>>, vector<128x128xbf16>
    %cst = arith.constant dense<0.000000e+00> : vector<8x128xf32>
    %3 = tpu.matmul %1, %2, %cst {dimension_numbers = #tpu.dot_dimension_numbers<[1], [0], [0], [1], [0, 0, 1, 1], [], []>} : vector<8x128xbf16>, vector<128x128xbf16>, vector<8x128xf32> -> vector<8x128xf32>
    %cst_3 = arith.constant dense<0.000000e+00> : vector<128xf32>
    %4 = vector.multi_reduction <add>, %3, %cst_3 [0] : vector<8x128xf32> to vector<128xf32>
    %5 = vector.shape_cast %4 : vector<128xf32> to vector<1x128xf32>
    %cst_4 = arith.constant 1.250000e-01 : f32
    %6 = vector.broadcast %cst_4 : f32 to vector<1x128xf32>
    %7 = arith.mulf %5, %6 : vector<1x128xf32>
    %8 = arith.mulf %3, %3 : vector<8x128xf32>
    %cst_5 = arith.constant dense<0.000000e+00> : vector<128xf32>
    %9 = vector.multi_reduction <add>, %8, %cst_5 [0] : vector<8x128xf32> to vector<128xf32>
    %10 = vector.shape_cast %9 : vector<128xf32> to vector<1x128xf32>
    %cst_6 = arith.constant 1.250000e-01 : f32
    %11 = vector.broadcast %cst_6 : f32 to vector<1x128xf32>
    %12 = arith.mulf %10, %11 : vector<1x128xf32>
    %13 = arith.mulf %7, %7 : vector<1x128xf32>
    %14 = arith.subf %12, %13 : vector<1x128xf32>
    %cst_7 = arith.constant 0.000000e+00 : f32
    %15 = vector.broadcast %cst_7 : f32 to vector<1x128xf32>
    %16 = arith.maximumf %14, %15 : vector<1x128xf32>
    %c0_8 = arith.constant 0 : index
    %c0_9 = arith.constant 0 : index
    %17 = vector.load %arg2[%c0_8, %c0_9] : memref<2x128xf32, #tpu.memory_space<vmem>>, vector<2x128xf32>
    %18 = vector.extract_strided_slice %17 {offsets = [0, 0], sizes = [1, 128], strides = [1, 1]} : vector<2x128xf32> to vector<1x128xf32>
    %cst_10 = arith.constant 9.99999974E-6 : f32
    %19 = vector.broadcast %cst_10 : f32 to vector<1x128xf32>
    %20 = arith.addf %16, %19 : vector<1x128xf32>
    %21 = math.rsqrt %20 : vector<1x128xf32>
    %22 = arith.mulf %18, %21 : vector<1x128xf32>
    %23 = vector.extract_strided_slice %17 {offsets = [1, 0], sizes = [1, 128], strides = [1, 1]} : vector<2x128xf32> to vector<1x128xf32>
    %24 = arith.mulf %7, %22 : vector<1x128xf32>
    %25 = arith.subf %23, %24 : vector<1x128xf32>
    %26 = vector.broadcast %22 : vector<1x128xf32> to vector<8x128xf32>
    %27 = arith.mulf %3, %26 : vector<8x128xf32>
    %28 = vector.broadcast %25 : vector<1x128xf32> to vector<8x128xf32>
    %29 = arith.addf %27, %28 : vector<8x128xf32>
    %cst_11 = arith.constant 2.000000e-01 : f32
    %30 = vector.broadcast %cst_11 : f32 to vector<8x128xf32>
    %31 = arith.mulf %30, %29 : vector<8x128xf32>
    %32 = arith.maximumf %29, %31 : vector<8x128xf32>
    %33 = arith.truncf %32 : vector<8x128xf32> to vector<8x128xbf16>
    %c0_12 = arith.constant 0 : index
    %c0_13 = arith.constant 0 : index
    %34 = vector.load %arg3[%c0_12, %c0_13] : memref<128x128xbf16, #tpu.memory_space<vmem>>, vector<128x128xbf16>
    %cst_14 = arith.constant dense<0.000000e+00> : vector<8x128xf32>
    %35 = tpu.matmul %33, %34, %cst_14 {dimension_numbers = #tpu.dot_dimension_numbers<[1], [0], [0], [1], [0, 0, 1, 1], [], []>} : vector<8x128xbf16>, vector<128x128xbf16>, vector<8x128xf32> -> vector<8x128xf32>
    %cst_15 = arith.constant dense<0.000000e+00> : vector<128xf32>
    %36 = vector.multi_reduction <add>, %35, %cst_15 [0] : vector<8x128xf32> to vector<128xf32>
    %37 = vector.shape_cast %36 : vector<128xf32> to vector<1x128xf32>
    %cst_16 = arith.constant 1.250000e-01 : f32
    %38 = vector.broadcast %cst_16 : f32 to vector<1x128xf32>
    %39 = arith.mulf %37, %38 : vector<1x128xf32>
    %40 = arith.mulf %35, %35 : vector<8x128xf32>
    %cst_17 = arith.constant dense<0.000000e+00> : vector<128xf32>
    %41 = vector.multi_reduction <add>, %40, %cst_17 [0] : vector<8x128xf32> to vector<128xf32>
    %42 = vector.shape_cast %41 : vector<128xf32> to vector<1x128xf32>
    %cst_18 = arith.constant 1.250000e-01 : f32
    %43 = vector.broadcast %cst_18 : f32 to vector<1x128xf32>
    %44 = arith.mulf %42, %43 : vector<1x128xf32>
    %45 = arith.mulf %39, %39 : vector<1x128xf32>
    %46 = arith.subf %44, %45 : vector<1x128xf32>
    %cst_19 = arith.constant 0.000000e+00 : f32
    %47 = vector.broadcast %cst_19 : f32 to vector<1x128xf32>
    %48 = arith.maximumf %46, %47 : vector<1x128xf32>
    %c0_20 = arith.constant 0 : index
    %c0_21 = arith.constant 0 : index
    %49 = vector.load %arg4[%c0_20, %c0_21] : memref<2x128xf32, #tpu.memory_space<vmem>>, vector<2x128xf32>
    %50 = vector.extract_strided_slice %49 {offsets = [0, 0], sizes = [1, 128], strides = [1, 1]} : vector<2x128xf32> to vector<1x128xf32>
    %cst_22 = arith.constant 9.99999974E-6 : f32
    %51 = vector.broadcast %cst_22 : f32 to vector<1x128xf32>
    %52 = arith.addf %48, %51 : vector<1x128xf32>
    %53 = math.rsqrt %52 : vector<1x128xf32>
    %54 = arith.mulf %50, %53 : vector<1x128xf32>
    %55 = vector.extract_strided_slice %49 {offsets = [1, 0], sizes = [1, 128], strides = [1, 1]} : vector<2x128xf32> to vector<1x128xf32>
    %56 = arith.mulf %39, %54 : vector<1x128xf32>
    %57 = arith.subf %55, %56 : vector<1x128xf32>
    %58 = vector.broadcast %54 : vector<1x128xf32> to vector<8x128xf32>
    %59 = arith.mulf %35, %58 : vector<8x128xf32>
    %60 = vector.broadcast %57 : vector<1x128xf32> to vector<8x128xf32>
    %61 = arith.addf %59, %60 : vector<8x128xf32>
    %cst_23 = arith.constant 2.000000e-01 : f32
    %62 = vector.broadcast %cst_23 : f32 to vector<8x128xf32>
    %63 = arith.mulf %62, %61 : vector<8x128xf32>
    %64 = arith.maximumf %61, %63 : vector<8x128xf32>
    %c0_24 = arith.constant 0 : index
    %c0_25 = arith.constant 0 : index
    %65 = vector.load %arg5[%c0_24, %c0_25] : memref<8x128xf32, #tpu.memory_space<vmem>>, vector<8x128xf32>
    tpu.vector_store %arg5[%c0_24, %c0_25], %64 {strides = array<i32>} : memref<8x128xf32, #tpu.memory_space<vmem>>, vector<8x128xf32>,
    return
  }
}

</mosaic_0001>

<llo_original>
// kernel: classifier2_forward.1
$region0: #{classifier2_forward.1}
  #allocation0 [shape = 'u32[]', space=smem, size = 0x4, offset = 0x4, fixed_abs, tag = 'smem constant byte address 0x4 - core index']
  #allocation1 [shape = 'u32[144,128]{1,0:T(1,128)}', space=vmem, size = 0x12000, scoped, tag = 'internal scratch']
  %s0 = inlined_call_operand.vmem [shape: f32[8,128], index: 0, kind: input, shape index: {}]
  %s1 = inlined_call_operand.hbm [shape: bf16[128,128], index: 1, kind: input, shape index: {}]
  %s2 = inlined_call_operand.vmem [shape: f32[2,128], index: 2, kind: input, shape index: {}]
  %s3 = inlined_call_operand.hbm [shape: bf16[128,128], index: 3, kind: input, shape index: {}]
  %s4 = inlined_call_operand.vmem [shape: f32[2,128], index: 4, kind: input, shape index: {}]
  %s5 = inlined_call_operand.hbm [shape: f32[8,128], index: 5, kind: output, shape index: {}]
  %s6 = sld [smem:[#allocation0]]
  $region38: #{classifier2_forward.1} parent=0
    _
  %s8 = ssub.s32 1, %s6
  %s9 = scalar_select 0, %s8, %s6
  $region1: #{classifier2_forward.1} parent=0
    #allocation2 [shape = 'u8[32768]{0}', space=vmem, size = 0x8000, scoped, tag = 'input window, operand 1, single buffered']
    #allocation3 [shape = 's32[1]{0}', space=sflag, size = 0x4, scoped, tag = 'scoped memory for classifier2_forward.1']
    #allocation4 [shape = 's32[1]{0}', space=sflag, size = 0x4, scoped, tag = 'scoped memory for classifier2_forward.1']
    #allocation5 [shape = 'u8[32768]{0}', space=vmem, size = 0x8000, scoped, tag = 'input window, operand 3, single buffered']
    #allocation6 [shape = 's32[1]{0}', space=sflag, size = 0x4, scoped, tag = 'scoped memory for classifier2_forward.1']
    #allocation7 [shape = 'u8[4096]{0}', space=vmem, size = 0x1000, scoped, tag = 'output window, operand 0, single buffered']
    %10 = vsyncpa [#allocation3], 0
    %11 = vsyncpa [#allocation6], 0
    %12 = vsyncpa [#allocation4], 0
    // Predicated region
    $region2: #{classifier2_forward.1} parent=1 // pred_check
      _
    $region3: #{classifier2_forward.1} parent=1 // pred_check_branch
      %14 = sbr.rel (0) target = $region5
    $region4: #{classifier2_forward.1} parent=1 // pred_region
      _
    $region5: #{classifier2_forward.1} parent=1 // pred_fallthru
      _
    // Predicated region
    $region6: #{classifier2_forward.1} parent=1 // pred_check
      _
    $region7: #{classifier2_forward.1} parent=1 // pred_check_branch
      %16 = sbr.rel (0) target = $region9
    $region8: #{classifier2_forward.1} parent=1 // pred_region
      %s18 = ssub.s32 1024, 1024
      %19 = vsyncadd [#allocation3], %s18
      %s20 = sshll.u32 [#allocation2], 4
      %s21 = int_to_ptr.vmem [resolvable:$true] %s20
      %26 = dma.hbm_to_vmem [thread:$0]  %s1, 1024, %s21, [#allocation3], 64, 64, 4
    $region9: #{classifier2_forward.1} parent=1 // pred_fallthru
      _
    // Predicated region
    $region10: #{classifier2_forward.1} parent=1 // pred_check
      _
    $region11: #{classifier2_forward.1} parent=1 // pred_check_branch
      %28 = sbr.rel (0) target = $region13
    $region12: #{classifier2_forward.1} parent=1 // pred_region
      _
    $region13: #{classifier2_forward.1} parent=1 // pred_fallthru
      _
    // Predicated region
    $region14: #{classifier2_forward.1} parent=1 // pred_check
      _
    $region15: #{classifier2_forward.1} parent=1 // pred_check_branch
      %30 = sbr.rel (0) target = $region17
    $region16: #{classifier2_forward.1} parent=1 // pred_region
      %s32 = ssub.s32 1024, 1024
      %33 = vsyncadd [#allocation6], %s32
      %s34 = sshll.u32 [#allocation5], 4
      %s35 = int_to_ptr.vmem [resolvable:$true] %s34
      %40 = dma.hbm_to_vmem [thread:$0]  %s3, 1024, %s35, [#allocation6], 64, 64, 4
    $region17: #{classifier2_forward.1} parent=1 // pred_fallthru
      _
    // Predicated region
    $region18: #{classifier2_forward.1} parent=1 // pred_check
      _
    $region19: #{classifier2_forward.1} parent=1 // pred_check_branch
      %42 = sbr.rel (0) target = $region21
    $region20: #{classifier2_forward.1} parent=1 // pred_region
      _
    $region21: #{classifier2_forward.1} parent=1 // pred_fallthru
      _
    // Predicated region
    $region22: #{classifier2_forward.1} parent=1 // pred_check
      _
    $region23: #{classifier2_forward.1} parent=1 // pred_check_branch
      %44 = sbr.rel (0) target = $region25
    $region24: #{classifier2_forward.1} parent=1 // pred_region
      %45 = dma.done [#allocation3], 1024
    $region25: #{classifier2_forward.1} parent=1 // pred_fallthru
      _
    // Predicated region
    $region26: #{classifier2_forward.1} parent=1 // pred_check
      _
    $region27: #{classifier2_forward.1} parent=1 // pred_check_branch
      %47 = sbr.rel (0) target = $region29
    $region28: #{classifier2_forward.1} parent=1 // pred_region
      %48 = dma.done [#allocation6], 1024
    $region29: #{classifier2_forward.1} parent=1 // pred_fallthru
      _
    %v50 = vld [vmem:[%s0] sm:$0xff]
    %v51 = vpack.c.bf16 %v50, %v50
    %v52 = vld [vmem:[#allocation2] sm:$0xf]
    %v53 = vld [vmem:[#allocation2 + $0x4] sm:$0xf]
    %v54 = vld [vmem:[#allocation2 + $0x8] sm:$0xf]
    %v55 = vld [vmem:[#allocation2 + $0xc] sm:$0xf]
    %v56 = vld [vmem:[#allocation2 + $0x10] sm:$0xf]
    %v57 = vld [vmem:[#allocation2 + $0x14] sm:$0xf]
    %v58 = vld [vmem:[#allocation2 + $0x18] sm:$0xf]
    %v59 = vld [vmem:[#allocation2 + $0x1c] sm:$0xf]
    %v60 = vld [vmem:[#allocation2 + $0x20] sm:$0xf]
    %v61 = vld [vmem:[#allocation2 + $0x24] sm:$0xf]
    %v62 = vld [vmem:[#allocation2 + $0x28] sm:$0xf]
    %v63 = vld [vmem:[#allocation2 + $0x2c] sm:$0xf]
    %v64 = vld [vmem:[#allocation2 + $0x30] sm:$0xf]
    %v65 = vld [vmem:[#allocation2 + $0x34] sm:$0xf]
    %v66 = vld [vmem:[#allocation2 + $0x38] sm:$0xf]
    %v67 = vld [vmem:[#allocation2 + $0x3c] sm:$0xf]
    %v84 = vunpack.c.l.b16 %v52
    %v85 = vunpack.c.l.b16 %v53
    %v86 = vunpack.c.l.b16 %v54
    %v87 = vunpack.c.l.b16 %v55
    %v88 = vunpack.c.l.b16 %v56
    %v89 = vunpack.c.l.b16 %v57
    %v90 = vunpack.c.l.b16 %v58
    %v91 = vunpack.c.l.b16 %v59
    %v92 = vunpack.c.l.b16 %v60
    %v93 = vunpack.c.l.b16 %v61
    %v94 = vunpack.c.l.b16 %v62
    %v95 = vunpack.c.l.b16 %v63
    %v96 = vunpack.c.l.b16 %v64
    %v97 = vunpack.c.l.b16 %v65
    %v98 = vunpack.c.l.b16 %v66
    %v99 = vunpack.c.l.b16 %v67
    %v100 = vpack.c.b16 %v85, %v84
    %v101 = vpack.c.b16 %v87, %v86
    %v102 = vpack.c.b16 %v89, %v88
    %v103 = vpack.c.b16 %v91, %v90
    %v104 = vpack.c.b16 %v93, %v92
    %v105 = vpack.c.b16 %v95, %v94
    %v106 = vpack.c.b16 %v97, %v96
    %v107 = vpack.c.b16 %v99, %v98
    %116 = vmatprep.subr.bf16.mxu0 0
    %117 = vmatpush1.bf16.msra.mxu0 %v107
    %118 = vmatprep.subr.bf16.mxu0 0
    %119 = vmatpush1.bf16.msra.mxu0 %v106
    %120 = vmatprep.subr.bf16.mxu0 0
    %121 = vmatpush1.bf16.msra.mxu0 %v105
    %122 = vmatprep.subr.bf16.mxu0 0
    %123 = vmatpush1.bf16.msra.mxu0 %v104
    %124 = vmatprep.subr.bf16.mxu0 0
    %125 = vmatpush1.bf16.msra.mxu0 %v103
    %126 = vmatprep.subr.bf16.mxu0 0
    %127 = vmatpush1.bf16.msra.mxu0 %v102
    %128 = vmatprep.subr.bf16.mxu0 0
    %129 = vmatpush1.bf16.msra.mxu0 %v101
    %130 = vmatprep.subr.bf16.mxu0 0
    %131 = vmatpush1.bf16.msra.mxu0 %v100
    %132 = vmatprep.subr.bf16.mxu0 0
    %133 = vmatpush2.bf16.msra.mxu0 0
    %134 = vmatprep.subr.bf16.mxu0 0
    %135 = vmatpush2.bf16.msra.mxu0 0
    %136 = vmatprep.subr.bf16.mxu0 0
    %137 = vmatpush2.bf16.msra.mxu0 0
    %138 = vmatprep.subr.bf16.mxu0 0
    %139 = vmatpush2.bf16.msra.mxu0 0
    %140 = vmatprep.subr.bf16.mxu0 0
    %141 = vmatpush2.bf16.msra.mxu0 0
    %142 = vmatprep.subr.bf16.mxu0 0
    %143 = vmatpush2.bf16.msra.mxu0 0
    %144 = vmatprep.subr.bf16.mxu0 0
    %145 = vmatpush2.bf16.msra.mxu0 0
    %146 = vmatprep.subr.bf16.mxu0 0
    %147 = vmatpush2.bf16.msra.mxu0 0
    %148 = vmatprep.mubr.bf16.mxu0 0
    %149 = vmatmul.mubr.bf16.gmra.mxu0 %v51
    %v150 = vpop.f32.mrf.mxu0
    %v151 = vadd.f32 0.0, %v150
    %v152 = vpop.f32.mrf.mxu0
    %v153 = vpop.f32.mrf.mxu0
    %v154 = vpop.f32.mrf.mxu0
    %155 = vdwg.mxu0
    %v156 = vrot.slane %v151, 4
    %v157 = vadd.f32 %v151, %v156
    %v158 = vrot.slane %v157, 2
    %v159 = vadd.f32 %v157, %v158
    %v160 = vrot.slane %v159, 1
    %v161 = vadd.f32 %v159, %v160
    %v162 = vmul.f32 %v161, 0.125
    %v163 = vmul.f32 %v151, %v151
    %v164 = vrot.slane %v163, 4
    %v165 = vadd.f32 %v163, %v164
    %v166 = vrot.slane %v165, 2
    %v167 = vadd.f32 %v165, %v166
    %v168 = vrot.slane %v167, 1
    %v169 = vadd.f32 %v167, %v168
    %v170 = vmul.f32 %v169, 0.125
    %v171 = vmul.f32 %v162, %v162
    %v172 = vsub.f32 %v170, %v171
    %v173 = vmax.f32 %v172, 0.0
    %v174 = vld [vmem:[%s2] sm:$0x3]
    %v175 = vadd.f32 %v173, 1e-05
    %v176 = vrsqrt.pop %v175
    %v177 = vmul.f32 %v174, %v176
    %v178 = vmul.f32 %v162, %v177
    %v180 = vrot.slane %v178, 7
    %v182 = vsub.f32 %v174, %v180
    %v183 = vlaneseq
    %v184 = vshrl.u32 %v183, 7
    %v185 = vsub.s32 0, %v184
    %v186 = vrot.slane %v177, %v185
    %v187 = vmul.f32 %v151, %v186
    %v188 = vlaneseq
    %v189 = vshrl.u32 %v188, 7
    %v190 = vsub.s32 1, %v189
    %v191 = vrot.slane %v182, %v190
    %v192 = vadd.f32 %v187, %v191
    %v193 = vmul.f32 %v192, 0.2
    %v194 = vmax.f32 %v192, %v193
    %v195 = vpack.c.bf16 %v194, %v194
    %v196 = vld [vmem:[#allocation5] sm:$0xf]
    %v197 = vld [vmem:[#allocation5 + $0x4] sm:$0xf]
    %v198 = vld [vmem:[#allocation5 + $0x8] sm:$0xf]
    %v199 = vld [vmem:[#allocation5 + $0xc] sm:$0xf]
    %v200 = vld [vmem:[#allocation5 + $0x10] sm:$0xf]
    %v201 = vld [vmem:[#allocation5 + $0x14] sm:$0xf]
    %v202 = vld [vmem:[#allocation5 + $0x18] sm:$0xf]
    %v203 = vld [vmem:[#allocation5 + $0x1c] sm:$0xf]
    %v204 = vld [vmem:[#allocation5 + $0x20] sm:$0xf]
    %v205 = vld [vmem:[#allocation5 + $0x24] sm:$0xf]
    %v206 = vld [vmem:[#allocation5 + $0x28] sm:$0xf]
    %v207 = vld [vmem:[#allocation5 + $0x2c] sm:$0xf]
    %v208 = vld [vmem:[#allocation5 + $0x30] sm:$0xf]
    %v209 = vld [vmem:[#allocation5 + $0x34] sm:$0xf]
    %v210 = vld [vmem:[#allocation5 + $0x38] sm:$0xf]
    %v211 = vld [vmem:[#allocation5 + $0x3c] sm:$0xf]
    %v228 = vunpack.c.l.b16 %v196
    %v229 = vunpack.c.l.b16 %v197
    %v230 = vunpack.c.l.b16 %v198
    %v231 = vunpack.c.l.b16 %v199
    %v232 = vunpack.c.l.b16 %v200
    %v233 = vunpack.c.l.b16 %v201
    %v234 = vunpack.c.l.b16 %v202
    %v235 = vunpack.c.l.b16 %v203
    %v236 = vunpack.c.l.b16 %v204
    %v237 = vunpack.c.l.b16 %v205
    %v238 = vunpack.c.l.b16 %v206
    %v239 = vunpack.c.l.b16 %v207
    %v240 = vunpack.c.l.b16 %v208
    %v241 = vunpack.c.l.b16 %v209
    %v242 = vunpack.c.l.b16 %v210
    %v243 = vunpack.c.l.b16 %v211
    %v244 = vpack.c.b16 %v229, %v228
    %v245 = vpack.c.b16 %v231, %v230
    %v246 = vpack.c.b16 %v233, %v232
    %v247 = vpack.c.b16 %v235, %v234
    %v248 = vpack.c.b16 %v237, %v236
    %v249 = vpack.c.b16 %v239, %v238
    %v250 = vpack.c.b16 %v241, %v240
    %v251 = vpack.c.b16 %v243, %v242
    %260 = vmatprep.subr.bf16.mxu0 0
    %261 = vmatpush1.bf16.msra.mxu0 %v251
    %262 = vmatprep.subr.bf16.mxu0 0
    %263 = vmatpush1.bf16.msra.mxu0 %v250
    %264 = vmatprep.subr.bf16.mxu0 0
    %265 = vmatpush1.bf16.msra.mxu0 %v249
    %266 = vmatprep.subr.bf16.mxu0 0
    %267 = vmatpush1.bf16.msra.mxu0 %v248
    %268 = vmatprep.subr.bf16.mxu0 0
    %269 = vmatpush1.bf16.msra.mxu0 %v247
    %270 = vmatprep.subr.bf16.mxu0 0
    %271 = vmatpush1.bf16.msra.mxu0 %v246
    %272 = vmatprep.subr.bf16.mxu0 0
    %273 = vmatpush1.bf16.msra.mxu0 %v245
    %274 = vmatprep.subr.bf16.mxu0 0
    %275 = vmatpush1.bf16.msra.mxu0 %v244
    %276 = vmatprep.subr.bf16.mxu0 0
    %277 = vmatpush2.bf16.msra.mxu0 0
    %278 = vmatprep.subr.bf16.mxu0 0
    %279 = vmatpush2.bf16.msra.mxu0 0
    %280 = vmatprep.subr.bf16.mxu0 0
    %281 = vmatpush2.bf16.msra.mxu0 0
    %282 = vmatprep.subr.bf16.mxu0 0
    %283 = vmatpush2.bf16.msra.mxu0 0
    %284 = vmatprep.subr.bf16.mxu0 0
    %285 = vmatpush2.bf16.msra.mxu0 0
    %286 = vmatprep.subr.bf16.mxu0 0
    %287 = vmatpush2.bf16.msra.mxu0 0
    %288 = vmatprep.subr.bf16.mxu0 0
    %289 = vmatpush2.bf16.msra.mxu0 0
    %290 = vmatprep.subr.bf16.mxu0 0
    %291 = vmatpush2.bf16.msra.mxu0 0
    %292 = vmatprep.mubr.bf16.mxu0 0
    %293 = vmatmul.mubr.bf16.gmra.mxu0 %v195
    %v294 = vpop.f32.mrf.mxu0
    %v295 = vadd.f32 0.0, %v294
    %v296 = vpop.f32.mrf.mxu0
    %v297 = vpop.f32.mrf.mxu0
    %v298 = vpop.f32.mrf.mxu0
    %299 = vdwg.mxu0
    %v300 = vrot.slane %v295, 4
    %v301 = vadd.f32 %v295, %v300
    %v302 = vrot.slane %v301, 2
    %v303 = vadd.f32 %v301, %v302
    %v304 = vrot.slane %v303, 1
    %v305 = vadd.f32 %v303, %v304
    %v306 = vmul.f32 %v305, 0.125
    %v307 = vmul.f32 %v295, %v295
    %v308 = vrot.slane %v307, 4
    %v309 = vadd.f32 %v307, %v308
    %v310 = vrot.slane %v309, 2
    %v311 = vadd.f32 %v309, %v310
    %v312 = vrot.slane %v311, 1
    %v313 = vadd.f32 %v311, %v312
    %v314 = vmul.f32 %v313, 0.125
    %v315 = vmul.f32 %v306, %v306
    %v316 = vsub.f32 %v314, %v315
    %v317 = vmax.f32 %v316, 0.0
    %v318 = vld [vmem:[%s4] sm:$0x3]
    %v319 = vadd.f32 %v317, 1e-05
    %v320 = vrsqrt.pop %v319
    %v321 = vmul.f32 %v318, %v320
    %v322 = vmul.f32 %v306, %v321
    %v324 = vrot.slane %v322, 7
    %v326 = vsub.f32 %v318, %v324
    %v327 = vlaneseq
    %v328 = vshrl.u32 %v327, 7
    %v329 = vsub.s32 0, %v328
    %v330 = vrot.slane %v321, %v329
    %v331 = vmul.f32 %v295, %v330
    %v332 = vlaneseq
    %v333 = vshrl.u32 %v332, 7
    %v334 = vsub.s32 1, %v333
    %v335 = vrot.slane %v326, %v334
    %v336 = vadd.f32 %v331, %v335
    %v337 = vmul.f32 %v336, 0.2
    %v338 = vmax.f32 %v336, %v337
    %339 = vst [vmem:[#allocation7] sm:$0xff] %v338
    // Predicated region
    $region30: #{classifier2_forward.1} parent=1 // pred_check
      _
    $region31: #{classifier2_forward.1} parent=1 // pred_check_branch
      %341 = sbr.rel (0) target = $region33
    $region32: #{classifier2_forward.1} parent=1 // pred_region
      %s343 = ssub.s32 128, 128
      %344 = vsyncadd [#allocation4], %s343
      %s346 = sshll.u32 [#allocation7], 4
      %s347 = int_to_ptr.vmem [resolvable:$true] %s346
      %349 = dma.vmem_to_hbm [thread:$0]  %s347, 128, %s5, [#allocation4]
    $region33: #{classifier2_forward.1} parent=1 // pred_fallthru
      _
    // Predicated region
    $region34: #{classifier2_forward.1} parent=1 // pred_check
      _
    $region35: #{classifier2_forward.1} parent=1 // pred_check_branch
      %351 = sbr.rel (0) target = $region37
    $region36: #{classifier2_forward.1} parent=1 // pred_region
      %352 = dma.done [#allocation4], 128
    $region37: #{classifier2_forward.1} parent=1 // pred_fallthru
      _
    %353 = vsyncpa [#allocation3], 1
    %354 = vsyncpa [#allocation6], 1
    %355 = vsyncpa [#allocation4], 1

</llo_original>
